<compile_context>
chip_gen: v6e
topology: v6e:2x2x1
jax: 0.10.0
libtpu: 0.0.40
codegen_flags: <defaults>
</compile_context>

<pallas_src>
import numpy as np
import jax
import jax.numpy as jnp
from jax.experimental import pallas as pl
from jax.experimental.pallas import tpu as pltpu

HI = jax.lax.Precision.HIGHEST

# ----- module hyper-parameters (small, deterministic) ------------------------
C = 4                 # channels of x1/x2 (conv1: 2C -> C, conv2: C -> C)
B, H, W = 2, 16, 16   # example input size


# ============================ pallas_call wrapper =============================

def cab_forward(params, x1_nchw, x2_nchw):
    """CAB.forward((x1, x2)) -> res, NCHW in / NCHW out (single fused kernel)."""
    Bn, Cn, Hn, Wn = x1_nchw.shape
    HW = Hn * Wn
    BC = Bn * Cn

    # NCHW -> (B*C, H*W): (batch, channel) packed on sublanes, spatial on lanes.
    x1 = x1_nchw.reshape(BC, HW)
    x2 = x2_nchw.reshape(BC, HW)

    # --- pack all conv weights/biases into one tiny f32 slab ------------------
    #   rows [0  , C )  cols [0, C) : conv1_w x1-half, TRANSPOSED  -> [c, o]
    #   rows [C  , 2C)  cols [0, C) : conv1_w x2-half, TRANSPOSED  -> [c, o]
    #   rows [2C , 3C)  cols [0, C) : conv2_w                       -> [o, c]
    #   rows [2C , 3C)  col   C     : conv2_b  (column orientation)
    #   row   3C        cols [0, C) : conv1_b  (row orientation)
    w1 = params["conv1_w"].reshape(Cn, 2 * Cn).astype(jnp.float32)
    w2 = params["conv2_w"].reshape(Cn, Cn).astype(jnp.float32)
    b1 = params["conv1_b"].astype(jnp.float32)
    b2 = params["conv2_b"].astype(jnp.float32)
    slab = jnp.zeros((3 * Cn + 1, Cn + 1), jnp.float32)
    slab = slab.at[0:Cn, 0:Cn].set(w1[:, :Cn].T)
    slab = slab.at[Cn:2 * Cn, 0:Cn].set(w1[:, Cn:].T)
    slab = slab.at[2 * Cn:3 * Cn, 0:Cn].set(w2)
    slab = slab.at[2 * Cn:3 * Cn, Cn].set(b2)
    slab = slab.at[3 * Cn, 0:Cn].set(b1)

    def kernel(x1_ref, x2_ref, p_ref, o_ref, att_ref):
        x1v = x1_ref[...]                                            # (B*C, HW)
        x2v = x2_ref[...]                                            # (B*C, HW)

        # AdaptiveAvgPool2d(1) of both concat halves: per-row spatial mean
        # (pure lane reduce on a full (8, 256) block).
        p1 = jnp.mean(x1v.astype(jnp.float32), axis=1, keepdims=True)  # (B*C, 1)
        p2 = jnp.mean(x2v.astype(jnp.float32), axis=1, keepdims=True)  # (B*C, 1)

        # Static views into the packed parameter slab (one DMA'd operand).
        w1aT = p_ref[0:Cn, 0:Cn]                   # (C, C)  [c, o]
        w1bT = p_ref[Cn:2 * Cn, 0:Cn]              # (C, C)  [c, o]
        w2m = p_ref[2 * Cn:3 * Cn, 0:Cn]           # (C, C)  [o, c]
        b2c = p_ref[2 * Cn:3 * Cn, Cn:Cn + 1]      # (C, 1)
        b1r = p_ref[3 * Cn:3 * Cn + 1, 0:Cn]       # (1, C)

        # Per-batch channel attention — all VPU mults + tiny reductions, no MXU.
        for b in range(Bn):
            p1b = p1[b * Cn:(b + 1) * Cn, :]                         # (C, 1)
            p2b = p2[b * Cn:(b + 1) * Cn, :]                         # (C, 1)
            # conv1 (1x1) over cat([x1,x2]) pooled vec, split over the concat:
            #   h[o] = sum_c w1a[o,c]*p1[c] + sum_c w1b[o,c]*p2[c] + b1[o]
            h = (jnp.sum(w1aT * p1b, axis=0, keepdims=True)
                 + jnp.sum(w1bT * p2b, axis=0, keepdims=True)
                 + b1r)                                              # (1, C)
            h = jnp.maximum(h, 0.0)                                  # ReLU
            # conv2 (1x1): a[o] = sum_c w2[o,c]*h[c] + b2[o] -> column layout
            a = jnp.sum(w2m * h, axis=1, keepdims=True) + b2c        # (C, 1)
            att_ref[b * Cn:(b + 1) * Cn, :] = jax.nn.sigmoid(a)

        # Epilogue: res = att * x2 + x1 — one full-width, lane-dense store.
        att = att_ref[...]                                           # (B*C, 1)
        o_ref[...] = (att * x2v + x1v).astype(o_ref.dtype)

    flops = 3 * BC * HW + Bn * (6 * Cn * Cn + 4 * Cn)
    bytes_accessed = 3 * BC * HW * 4 + int(slab.size) * 4

    out = pl.pallas_call(
        kernel,
        out_shape=jax.ShapeDtypeStruct((BC, HW), x1.dtype),
        grid=(1,),
        in_specs=[pl.BlockSpec((BC, HW), lambda i: (0, 0)),
                  pl.BlockSpec((BC, HW), lambda i: (0, 0)),
                  pl.BlockSpec((3 * Cn + 1, Cn + 1), lambda i: (0, 0))],
        out_specs=pl.BlockSpec((BC, HW), lambda i: (0, 0)),
        scratch_shapes=[pltpu.VMEM((BC, 1), jnp.float32)],
        input_output_aliases={0: 0},      # res may overwrite x1's buffer
        cost_estimate=pl.CostEstimate(flops=flops,
                                      transcendentals=Bn * Cn,
                                      bytes_accessed=bytes_accessed),
        compiler_params=pltpu.CompilerParams(
            dimension_semantics=("arbitrary",)),  # single step; no core split
    )(x1, x2, slab)

    return out.reshape(Bn, Cn, Hn, Wn)


# ============================== parameter init ================================

def init_params(key):
    ks = jax.random.split(key, 4)
    return dict(
        conv1_w=0.3 * jax.random.normal(ks[0], (C, 2 * C, 1, 1), jnp.float32),
        conv1_b=0.1 * jax.random.normal(ks[1], (C,), jnp.float32),
        conv2_w=0.3 * jax.random.normal(ks[2], (C, C, 1, 1), jnp.float32),
        conv2_b=0.1 * jax.random.normal(ks[3], (C,), jnp.float32),
    )


# ======================= pure-JAX reference (for checking) ====================

def ref_forward(params, x1, x2):
    xcat = jnp.concatenate([x1, x2], axis=1)                      # (B, 2C, H, W)
    pooled = jnp.mean(xcat, axis=(2, 3))                          # (B, 2C)
    h = jnp.einsum("bc,oc->bo", pooled, params["conv1_w"][:, :, 0, 0],
                   precision=HI) + params["conv1_b"]
    h = jnp.maximum(h, 0.0)
    a = jnp.einsum("bc,oc->bo", h, params["conv2_w"][:, :, 0, 0],
                   precision=HI) + params["conv2_b"]
    att = jax.nn.sigmoid(a)[:, :, None, None]                     # (B, C, 1, 1)
    return att * x2 + x1


# ==================================== main ====================================

if __name__ == "__main__":
    key = jax.random.PRNGKey(0)
    k1, k2, kp = jax.random.split(key, 3)

    x1 = jax.random.normal(k1, (B, C, H, W), jnp.float32)
    x2 = jax.random.normal(k2, (B, C, H, W), jnp.float32)
    params = init_params(kp)

    fwd = jax.jit(lambda a, b: cab_forward(params, a, b))
    res = fwd(x1, x2)
    jax.block_until_ready(res)

    ref = ref_forward(params, x1, x2)
    np.testing.assert_allclose(np.asarray(res), np.asarray(ref),
                               rtol=1e-4, atol=1e-4)
    assert res.shape == (B, C, H, W)
    print("KERNEL_OK")
</pallas_src>

<mosaic_0001>
module attributes {stable_mosaic.version = 11 : i64} {
  func.func @kernel(%arg0: i32, %arg1: memref<8x256xf32, #tpu.memory_space<vmem>>, %arg2: memref<8x256xf32, #tpu.memory_space<vmem>>, %arg3: memref<13x5xf32, #tpu.memory_space<vmem>>, %arg4: memref<8x256xf32, #tpu.memory_space<vmem>>, %arg5: memref<8x1xf32, #tpu.memory_space<vmem>>) attributes {dimension_semantics = [#tpu.dimension_semantics<arbitrary>], iteration_bounds = array<i64: 1>, scalar_prefetch = 0 : i64, scratch_operands = 1 : i64, tpu.core_type = #tpu.core_type<tc>, window_params = [{pipeline_mode = #tpu.pipeline_mode<synchronous>, transform_indices = @transform_0, window_bounds = array<i64: 8, 256>}, {pipeline_mode = #tpu.pipeline_mode<synchronous>, transform_indices = @transform_1, window_bounds = array<i64: 8, 256>}, {pipeline_mode = #tpu.pipeline_mode<synchronous>, transform_indices = @transform_2, window_bounds = array<i64: 13, 5>}, {pipeline_mode = #tpu.pipeline_mode<synchronous>, transform_indices = @transform_3, window_bounds = array<i64: 8, 256>}]} {
    %c0 = arith.constant 0 : index
    %c0_0 = arith.constant 0 : index
    %0 = vector.load %arg1[%c0, %c0_0] : memref<8x256xf32, #tpu.memory_space<vmem>>, vector<8x256xf32>
    %c0_1 = arith.constant 0 : index
    %c0_2 = arith.constant 0 : index
    %1 = vector.load %arg2[%c0_1, %c0_2] : memref<8x256xf32, #tpu.memory_space<vmem>>, vector<8x256xf32>
    %cst = arith.constant dense<0.000000e+00> : vector<8xf32>
    %2 = vector.multi_reduction <add>, %0, %cst [1] : vector<8x256xf32> to vector<8xf32>
    %3 = vector.shape_cast %2 : vector<8xf32> to vector<8x1xf32>
    %cst_3 = arith.constant 2.560000e+02 : f32
    %4 = vector.broadcast %cst_3 : f32 to vector<8x1xf32>
    %5 = arith.divf %3, %4 : vector<8x1xf32>
    %cst_4 = arith.constant dense<0.000000e+00> : vector<8xf32>
    %6 = vector.multi_reduction <add>, %1, %cst_4 [1] : vector<8x256xf32> to vector<8xf32>
    %7 = vector.shape_cast %6 : vector<8xf32> to vector<8x1xf32>
    %cst_5 = arith.constant 2.560000e+02 : f32
    %8 = vector.broadcast %cst_5 : f32 to vector<8x1xf32>
    %9 = arith.divf %7, %8 : vector<8x1xf32>
    %c0_6 = arith.constant 0 : index
    %c0_7 = arith.constant 0 : index
    %10 = vector.load %arg3[%c0_6, %c0_7] : memref<13x5xf32, #tpu.memory_space<vmem>>, vector<4x4xf32>
    %c4 = arith.constant 4 : index
    %c0_8 = arith.constant 0 : index
    %11 = vector.load %arg3[%c4, %c0_8] : memref<13x5xf32, #tpu.memory_space<vmem>>, vector<4x4xf32>
    %c8 = arith.constant 8 : index
    %c0_9 = arith.constant 0 : index
    %12 = vector.load %arg3[%c8, %c0_9] : memref<13x5xf32, #tpu.memory_space<vmem>>, vector<4x4xf32>
    %c8_10 = arith.constant 8 : index
    %c4_11 = arith.constant 4 : index
    %13 = vector.load %arg3[%c8_10, %c4_11] : memref<13x5xf32, #tpu.memory_space<vmem>>, vector<4x1xf32>
    %c12 = arith.constant 12 : index
    %c0_12 = arith.constant 0 : index
    %14 = vector.load %arg3[%c12, %c0_12] : memref<13x5xf32, #tpu.memory_space<vmem>>, vector<1x4xf32>
    %15 = vector.extract_strided_slice %5 {offsets = [0, 0], sizes = [4, 1], strides = [1, 1]} : vector<8x1xf32> to vector<4x1xf32>
    %16 = vector.extract_strided_slice %9 {offsets = [0, 0], sizes = [4, 1], strides = [1, 1]} : vector<8x1xf32> to vector<4x1xf32>
    %17 = vector.broadcast %15 : vector<4x1xf32> to vector<4x4xf32>
    %18 = arith.mulf %10, %17 : vector<4x4xf32>
    %cst_13 = arith.constant dense<0.000000e+00> : vector<4xf32>
    %19 = vector.multi_reduction <add>, %18, %cst_13 [0] : vector<4x4xf32> to vector<4xf32>
    %20 = vector.shape_cast %19 : vector<4xf32> to vector<1x4xf32>
    %21 = vector.broadcast %16 : vector<4x1xf32> to vector<4x4xf32>
    %22 = arith.mulf %11, %21 : vector<4x4xf32>
    %cst_14 = arith.constant dense<0.000000e+00> : vector<4xf32>
    %23 = vector.multi_reduction <add>, %22, %cst_14 [0] : vector<4x4xf32> to vector<4xf32>
    %24 = vector.shape_cast %23 : vector<4xf32> to vector<1x4xf32>
    %25 = arith.addf %20, %24 : vector<1x4xf32>
    %26 = arith.addf %25, %14 : vector<1x4xf32>
    %cst_15 = arith.constant 0.000000e+00 : f32
    %27 = vector.broadcast %cst_15 : f32 to vector<1x4xf32>
    %28 = arith.maximumf %26, %27 : vector<1x4xf32>
    %29 = vector.broadcast %28 : vector<1x4xf32> to vector<4x4xf32>
    %30 = arith.mulf %12, %29 : vector<4x4xf32>
    %cst_16 = arith.constant dense<0.000000e+00> : vector<4xf32>
    %31 = vector.multi_reduction <add>, %30, %cst_16 [1] : vector<4x4xf32> to vector<4xf32>
    %32 = vector.shape_cast %31 : vector<4xf32> to vector<4x1xf32>
    %33 = arith.addf %32, %13 : vector<4x1xf32>
    %34 = arith.negf %33 : vector<4x1xf32>
    %35 = math.exp %34 : vector<4x1xf32>
    %cst_17 = arith.constant 1.000000e+00 : f32
    %36 = vector.broadcast %cst_17 : f32 to vector<4x1xf32>
    %37 = arith.addf %36, %35 : vector<4x1xf32>
    %38 = arith.divf %36, %37 : vector<4x1xf32>
    %c0_18 = arith.constant 0 : index
    %c0_19 = arith.constant 0 : index
    %39 = vector.load %arg5[%c0_18, %c0_19] : memref<8x1xf32, #tpu.memory_space<vmem>>, vector<4x1xf32>
    tpu.vector_store %arg5[%c0_18, %c0_19], %38 {strides = array<i32>} : memref<8x1xf32, #tpu.memory_space<vmem>>, vector<4x1xf32>,
    %40 = vector.extract_strided_slice %5 {offsets = [4, 0], sizes = [4, 1], strides = [1, 1]} : vector<8x1xf32> to vector<4x1xf32>
    %41 = vector.extract_strided_slice %9 {offsets = [4, 0], sizes = [4, 1], strides = [1, 1]} : vector<8x1xf32> to vector<4x1xf32>
    %42 = vector.broadcast %40 : vector<4x1xf32> to vector<4x4xf32>
    %43 = arith.mulf %10, %42 : vector<4x4xf32>
    %cst_20 = arith.constant dense<0.000000e+00> : vector<4xf32>
    %44 = vector.multi_reduction <add>, %43, %cst_20 [0] : vector<4x4xf32> to vector<4xf32>
    %45 = vector.shape_cast %44 : vector<4xf32> to vector<1x4xf32>
    %46 = vector.broadcast %41 : vector<4x1xf32> to vector<4x4xf32>
    %47 = arith.mulf %11, %46 : vector<4x4xf32>
    %cst_21 = arith.constant dense<0.000000e+00> : vector<4xf32>
    %48 = vector.multi_reduction <add>, %47, %cst_21 [0] : vector<4x4xf32> to vector<4xf32>
    %49 = vector.shape_cast %48 : vector<4xf32> to vector<1x4xf32>
    %50 = arith.addf %45, %49 : vector<1x4xf32>
    %51 = arith.addf %50, %14 : vector<1x4xf32>
    %cst_22 = arith.constant 0.000000e+00 : f32
    %52 = vector.broadcast %cst_22 : f32 to vector<1x4xf32>
    %53 = arith.maximumf %51, %52 : vector<1x4xf32>
    %54 = vector.broadcast %53 : vector<1x4xf32> to vector<4x4xf32>
    %55 = arith.mulf %12, %54 : vector<4x4xf32>
    %cst_23 = arith.constant dense<0.000000e+00> : vector<4xf32>
    %56 = vector.multi_reduction <add>, %55, %cst_23 [1] : vector<4x4xf32> to vector<4xf32>
    %57 = vector.shape_cast %56 : vector<4xf32> to vector<4x1xf32>
    %58 = arith.addf %57, %13 : vector<4x1xf32>
    %59 = arith.negf %58 : vector<4x1xf32>
    %60 = math.exp %59 : vector<4x1xf32>
    %cst_24 = arith.constant 1.000000e+00 : f32
    %61 = vector.broadcast %cst_24 : f32 to vector<4x1xf32>
    %62 = arith.addf %61, %60 : vector<4x1xf32>
    %63 = arith.divf %61, %62 : vector<4x1xf32>
    %c4_25 = arith.constant 4 : index
    %c0_26 = arith.constant 0 : index
    %64 = vector.load %arg5[%c4_25, %c0_26] : memref<8x1xf32, #tpu.memory_space<vmem>>, vector<4x1xf32>
    tpu.vector_store %arg5[%c4_25, %c0_26], %63 {strides = array<i32>} : memref<8x1xf32, #tpu.memory_space<vmem>>, vector<4x1xf32>,
    %c0_27 = arith.constant 0 : index
    %c0_28 = arith.constant 0 : index
    %65 = vector.load %arg5[%c0_27, %c0_28] : memref<8x1xf32, #tpu.memory_space<vmem>>, vector<8x1xf32>
    %66 = vector.broadcast %65 : vector<8x1xf32> to vector<8x256xf32>
    %67 = arith.mulf %66, %1 : vector<8x256xf32>
    %68 = arith.addf %67, %0 : vector<8x256xf32>
    %c0_29 = arith.constant 0 : index
    %c0_30 = arith.constant 0 : index
    %69 = vector.load %arg4[%c0_29, %c0_30] : memref<8x256xf32, #tpu.memory_space<vmem>>, vector<8x256xf32>
    tpu.vector_store %arg4[%c0_29, %c0_30], %68 {strides = array<i32>} : memref<8x256xf32, #tpu.memory_space<vmem>>, vector<8x256xf32>,
    return
  }
  func.func @transform_0(%arg0: i32) -> (i32, i32) {
    %c0_i32 = arith.constant 0 : i32
    %c0_i32_0 = arith.constant 0 : i32
    %c0_i32_1 = arith.constant 0 : i32
    return %c0_i32, %c0_i32_0 : i32, i32
  }
  func.func @transform_1(%arg0: i32) -> (i32, i32) {
    %c0_i32 = arith.constant 0 : i32
    %c0_i32_0 = arith.constant 0 : i32
    %c0_i32_1 = arith.constant 0 : i32
    return %c0_i32, %c0_i32_0 : i32, i32
  }
  func.func @transform_2(%arg0: i32) -> (i32, i32) {
    %c0_i32 = arith.constant 0 : i32
    %c0_i32_0 = arith.constant 0 : i32
    %c0_i32_1 = arith.constant 0 : i32
    return %c0_i32, %c0_i32_0 : i32, i32
  }
  func.func @transform_3(%arg0: i32) -> (i32, i32) {
    %c0_i32 = arith.constant 0 : i32
    %c0_i32_0 = arith.constant 0 : i32
    %c0_i32_1 = arith.constant 0 : i32
    return %c0_i32, %c0_i32_0 : i32, i32
  }
}

</mosaic_0001>

<llo_original>
// kernel: _lambda_.1
$region0: #{_lambda_.1}
  #allocation0 [shape = 'u32[]', space=smem, size = 0x4, offset = 0x4, fixed_abs, tag = 'smem constant byte address 0x4 - core index']
  #allocation1 [shape = 'u32[144,128]{1,0:T(1,128)}', space=vmem, size = 0x12000, scoped, tag = 'internal scratch']
  #allocation2 [shape = 'f32[8,1]{1,0:T(8,128)}', space=vmem, size = 0x1000, scoped, tag = 'scratch operand']
  %s0 = inlined_call_operand.vmem [shape: f32[8,256], index: 0, kind: input, shape index: {}, may-alias: {0,3}]
  %s1 = inlined_call_operand.vmem [shape: f32[8,256], index: 1, kind: input, shape index: {}]
  %s2 = inlined_call_operand.vmem [shape: f32[13,5], index: 2, kind: input, shape index: {}]
  %s3 = inlined_call_operand.vmem [shape: f32[8,256], index: 3, kind: output, shape index: {}, may-alias: {0,3}]
  %s4 = sld [smem:[#allocation0]]
  $region22: #{_lambda_.1} parent=0
    _
  %s6 = ssub.s32 1, %s4
  %s7 = scalar_select 0, %s6, %s4
  // Predicated region
  $region2: #{_lambda_.1} parent=0 // pred_check
    _
  $region3: #{_lambda_.1} parent=0 // pred_check_branch
    %9 = sbr.rel (0) target = $region5
  $region4: #{_lambda_.1} parent=0 // pred_region
    _
  $region5: #{_lambda_.1} parent=0 // pred_fallthru
    _
  // Predicated region
  $region6: #{_lambda_.1} parent=0 // pred_check
    _
  $region7: #{_lambda_.1} parent=0 // pred_check_branch
    %11 = sbr.rel (0) target = $region9
  $region8: #{_lambda_.1} parent=0 // pred_region
    _
  $region9: #{_lambda_.1} parent=0 // pred_fallthru
    _
  // Predicated region
  $region10: #{_lambda_.1} parent=0 // pred_check
    _
  $region11: #{_lambda_.1} parent=0 // pred_check_branch
    %13 = sbr.rel (0) target = $region13
  $region12: #{_lambda_.1} parent=0 // pred_region
    _
  $region13: #{_lambda_.1} parent=0 // pred_fallthru
    _
  %v14 = vld [vmem:[%s0] sm:$0xff]
  %v15 = vld [vmem:[%s0 + $0x8] sm:$0xff]
  %v16 = vld [vmem:[%s1] sm:$0xff]
  %v17 = vld [vmem:[%s1 + $0x8] sm:$0xff]
  %v18 = vadd.f32 %v14, %v15
  %19 = vadd.xlane.f32.xlu0 %v18
  %v20 = vpop.xlane.xlu0 %19
  %v21 = vrcp.pop 256.0
  %v22 = vmul.f32 %v20, %v21
  %v23 = vadd.f32 %v16, %v17
  %24 = vadd.xlane.f32.xlu0 %v23
  %v25 = vpop.xlane.xlu0 %24
  %v26 = vmul.f32 %v25, %v21
  %v27 = vld [vmem:[%s2] sm:$0xf]
  %v28 = vld [vmem:[%s2 + $0x4] sm:$0xf]
  %v29 = vld [vmem:[%s2 + $0x8] sm:$0xf]
  %v30 = vld [vmem:[%s2 + $0xc] sm:$0x1]
  %v31 = vmul.f32 %v27, %v22
  %vm32 = vcmask 27648
  %v33 = vsel %vm32, %v31, 0.0
  %v34 = vrot.slane %v33, 4
  %v35 = vadd.f32 %v33, %v34
  %v36 = vrot.slane %v35, 2
  %v37 = vadd.f32 %v35, %v36
  %v38 = vrot.slane %v37, 1
  %v39 = vadd.f32 %v37, %v38
  %v40 = vmul.f32 %v28, %v26
  %v41 = vsel %vm32, %v40, 0.0
  %v42 = vrot.slane %v41, 4
  %v43 = vadd.f32 %v41, %v42
  %v44 = vrot.slane %v43, 2
  %v45 = vadd.f32 %v43, %v44
  %v46 = vrot.slane %v45, 1
  %v47 = vadd.f32 %v45, %v46
  %v48 = vadd.f32 %v39, %v47
  %v49 = vadd.f32 %v48, %v30
  %v50 = vmax.f32 %v49, 0.0
  %v51 = vlaneseq
  %v52 = vshrl.u32 %v51, 7
  %v53 = vsub.s32 0, %v52
  %v54 = vrot.slane %v50, %v53
  %v55 = vmul.f32 %v29, %v54
  %v56 = vsel %vm32, %v55, 0.0
  %57 = vadd.xlane.f32.xlu0 %v56
  %v58 = vpop.xlane.xlu0 %57
  %v59 = vadd.f32 %v58, %v29
  %v60 = vxor.u32 %v59, 2147483648
  %v61 = vmul.f32 %v60, 1.442695
  %v62 = vpow.pop %v61
  %v63 = vadd.f32 %v62, 1.0
  %v64 = vrcp.pop %v63
  %v65 = vmul.f32 1.0, %v64
  %67 = vrot.lane.b32.xlu0 %v65, 124
  %v68 = vpop.permute.xlu0 %67
  %vm70 = vcmask 3072
  %71 = vst.msk [vmem:[#allocation2] sm:$0xf] %vm70, %v68
  %v73 = vrot.slane %v22, 4
  %v75 = vmul.f32 %v27, %v73
  %v76 = vsel %vm32, %v75, 0.0
  %v77 = vrot.slane %v76, 4
  %v78 = vadd.f32 %v76, %v77
  %v79 = vrot.slane %v78, 2
  %v80 = vadd.f32 %v78, %v79
  %v81 = vrot.slane %v80, 1
  %v82 = vadd.f32 %v80, %v81
  %v84 = vrot.slane %v26, 4
  %v86 = vmul.f32 %v28, %v84
  %v87 = vsel %vm32, %v86, 0.0
  %v88 = vrot.slane %v87, 4
  %v89 = vadd.f32 %v87, %v88
  %v90 = vrot.slane %v89, 2
  %v91 = vadd.f32 %v89, %v90
  %v92 = vrot.slane %v91, 1
  %v93 = vadd.f32 %v91, %v92
  %v94 = vadd.f32 %v82, %v93
  %v95 = vadd.f32 %v94, %v30
  %v96 = vmax.f32 %v95, 0.0
  %v97 = vlaneseq
  %v98 = vshrl.u32 %v97, 7
  %v99 = vsub.s32 0, %v98
  %v100 = vrot.slane %v96, %v99
  %v101 = vmul.f32 %v29, %v100
  %v102 = vsel %vm32, %v101, 0.0
  %103 = vadd.xlane.f32.xlu0 %v102
  %v104 = vpop.xlane.xlu0 %103
  %v105 = vadd.f32 %v104, %v29
  %v106 = vxor.u32 %v105, 2147483648
  %v107 = vmul.f32 %v106, 1.442695
  %v108 = vpow.pop %v107
  %v109 = vadd.f32 %v108, 1.0
  %v110 = vrcp.pop %v109
  %v111 = vmul.f32 1.0, %v110
  %113 = vrot.lane.b32.xlu0 %v111, 124
  %v114 = vpop.permute.xlu0 %113
  %116 = vst.msk [vmem:[#allocation2 + $0x4] sm:$0xf] %vm70, %v114
  %v117 = vld [vmem:[#allocation2] sm:$0xff]
  %119 = vset.pattern.permute.xlu0 0
  %120 = vperm.xlu0 %119, %v117
  %v121 = vpop.permute.xlu0 %120
  %v123 = vmul.f32 %v121, %v16
  %v124 = vmul.f32 %v121, %v17
  %v125 = vadd.f32 %v123, %v14
  %v126 = vadd.f32 %v124, %v15
  %127 = vst [vmem:[%s3] sm:$0xff] %v125
  %128 = vst [vmem:[%s3 + $0x8] sm:$0xff] %v126
  // Predicated region
  $region14: #{_lambda_.1} parent=0 // pred_check
    _
  $region15: #{_lambda_.1} parent=0 // pred_check_branch
    %130 = sbr.rel (0) target = $region17
  $region16: #{_lambda_.1} parent=0 // pred_region
    _
  $region17: #{_lambda_.1} parent=0 // pred_fallthru
    _
  // Predicated region
  $region18: #{_lambda_.1} parent=0 // pred_check
    _
  $region19: #{_lambda_.1} parent=0 // pred_check_branch
    %132 = sbr.rel (0) target = $region21
  $region20: #{_lambda_.1} parent=0 // pred_region
    _
  $region21: #{_lambda_.1} parent=0 // pred_fallthru
    _

</llo_original>
